<compile_context>
chip_gen: v5e
topology: v5e:2x2
jax: 0.10.0
libtpu: 0.0.40
codegen_flags: <defaults>
</compile_context>

<pallas_src>
import jax
import jax.numpy as jnp
import numpy as np
from jax.experimental import pallas as pl
from jax.experimental.pallas import tpu as pltpu


# ---------------------------------------------------------------------------
# Kernel
# ---------------------------------------------------------------------------
def _make_attention_kernel(TB, S_pad, D, H, share_xa, return_sequences, mm_dtype):
    """Kernel over one chunk of TB batches (R = TB * S_pad flattened rows)."""
    R = TB * S_pad

    def _seq_lane_to_rows(vals):
        # (TB, S_pad) with the sequence in lanes -> (R, 1) with one weight per
        # row, matching the x row-slab layout.  Written with broadcast +
        # iota-select + lane-reduce only (all guaranteed to lower) instead of a
        # generic lane->sublane reshape, which Mosaic may reject.
        # TODO(synk): swap for a native relayout if S_pad grows past ~128
        # (this helper does O(TB * S_pad^2) cheap VPU work).
        ii = jax.lax.broadcasted_iota(jnp.int32, (TB, S_pad, S_pad), 1)
        jj = jax.lax.broadcasted_iota(jnp.int32, (TB, S_pad, S_pad), 2)
        picked = jnp.where(ii == jj, vals.reshape(TB, 1, S_pad), 0.0)
        return jnp.sum(picked, axis=-1, keepdims=True).reshape(R, 1)

    def _body(x, xa_mm, m, w1, b1, w2row, b2, out_ref):
        # linear1 + tanh : one MXU matmul over the whole (R, D) row slab.
        h = jnp.tanh(
            jnp.dot(xa_mm, w1, preferred_element_type=jnp.float32) + b1
        )                                                           # (R, H) f32

        # linear2 (H -> 1) as VPU multiply + lane reduction, reduced straight
        # into the lane-dense (TB, S_pad) layout so exp / mask / softmax touch
        # ~S_pad x fewer vregs than the old (R, 1) column.
        logits = jnp.sum((h * w2row).reshape(TB, S_pad, H), axis=-1) + b2  # (TB, S_pad)

        # softmax_mask in the lane-dense domain.
        e = jnp.exp(logits) * m                                     # (TB, S_pad)
        denom = jnp.sum(e, axis=-1, keepdims=True) + 1e-6           # (TB, 1)
        inv = pl.reciprocal(denom, approx=True)                     # EUP slot
        inv = inv * (2.0 - denom * inv)                             # Newton -> ~f32 exact

        attn = _seq_lane_to_rows(e * inv)                           # (R, 1) per-row weight
        weighted = x * attn                                         # (R, D) f32

        if return_sequences:
            out_ref[...] = weighted                                 # lane-dense (R, D) store
        else:
            out_ref[...] = jnp.sum(weighted.reshape(TB, S_pad, D), axis=1)  # (TB, D)

    if share_xa:
        def kernel(x_ref, m_ref, w1_ref, b1_ref, w2_ref, b2_ref, out_ref):
            x = x_ref[...]
            _body(x, x.astype(mm_dtype), m_ref[...], w1_ref[...], b1_ref[...],
                  w2_ref[...], b2_ref[0], out_ref)
    else:
        def kernel(x_ref, xa_ref, m_ref, w1_ref, b1_ref, w2_ref, b2_ref, out_ref):
            _body(x_ref[...], xa_ref[...], m_ref[...], w1_ref[...], b1_ref[...],
                  w2_ref[...], b2_ref[0], out_ref)

    return kernel


# ---------------------------------------------------------------------------
# Layout-aware VMEM sizing / chunk selection
# ---------------------------------------------------------------------------
def _tile_bytes(rows, cols, itemsize):
    """Bytes a (rows, cols) block occupies in VMEM after (8, 128) tile padding."""
    return (-(-rows // 8) * 8) * (-(-cols // 128) * 128) * itemsize


def _chunk_vmem_bytes(tb, S_pad, D, H, share_xa, return_sequences, mm_itemsize):
    """Per-grid-step VMEM estimate: double-buffered blocks + in-kernel temps."""
    R = tb * S_pad
    n = 2 * _tile_bytes(R, D, 4)                           # x rows (f32), x2 buffers
    if not share_xa:
        n += 2 * _tile_bytes(R, D, mm_itemsize)            # x_attention rows
    n += 2 * _tile_bytes(tb, S_pad, 4)                     # mask block
    out_rows = R if return_sequences else tb
    n += 2 * _tile_bytes(out_rows, D, 4)                   # output block, x2 buffers
    n += 2 * _tile_bytes(R, H, 4)                          # hidden activation + temps
    n += tb * _tile_bytes(S_pad, S_pad, 4)                 # iota-select relayout temp
    n += _tile_bytes(D, H, mm_itemsize) + 2 * _tile_bytes(1, H, 4)   # weights
    return n


def _choose_tb(B, S_pad, D, H, share_xa, return_sequences, mm_itemsize,
               budget_bytes=None):
    """Largest sublane-aligned batch chunk whose blocks fit the VMEM budget,
    preferring >= 2 grid steps (v7x megacore + pipeline overlap)."""
    if budget_bytes is None:
        try:
            cap = getattr(pltpu.get_tpu_info(), "vmem_capacity_bytes", 64 << 20)
        except Exception:
            cap = 64 << 20                                 # v7x per-core floor
        budget_bytes = min(16 << 20, cap // 4)
    cands = [t for t in range(8 * (B // 8), 0, -8) if B % t == 0]
    multi = [t for t in cands if B // t >= 2]              # keep the grid >= 2 steps
    for t in (multi or cands):
        if _chunk_vmem_bytes(t, S_pad, D, H, share_xa, return_sequences,
                             mm_itemsize) <= budget_bytes:
            return t
    if multi or cands:
        return (multi or cands)[-1]                        # nothing fits: smallest chunk
    # TODO(synk): pad B to a multiple of 8 for awkward batch sizes instead of
    # falling back to a single full-batch grid step.
    return B


# ---------------------------------------------------------------------------
# Wrapper
# ---------------------------------------------------------------------------
def attention_layer(x_text, mask, params, x_attention=None,
                    return_sequences=False, tb=None, matmul_dtype=jnp.float32):
    """Pallas implementation of AttentionLayer.forward.

    x_text:       [B, S, D] float
    mask:         [B, S]    (int/bool/float; treated as float mask)
    params:       (w1 [D,H], b1 [H], w2 [H], b2 [])
    matmul_dtype: dtype of the MXU operands (jnp.bfloat16 on v6e/v7x halves the
                  dominant HBM/VMEM stream; default f32 matches the module).
    returns:      [B, D] if not return_sequences else [B, S, D]
    """
    share_xa = x_attention is None
    B, S, D = x_text.shape
    w1, b1, w2, b2 = params
    H = w1.shape[1]

    # Pad S to a multiple of 8 so every batch's rows start on a sublane
    # boundary; padded rows get mask=0, so they contribute exactly zero.
    S_pad = ((S + 7) // 8) * 8
    pad = S_pad - S

    x = x_text.astype(jnp.float32)
    m = mask.astype(jnp.float32)
    xa = None if share_xa else x_attention.astype(matmul_dtype)
    if pad:
        x = jnp.pad(x, ((0, 0), (0, pad), (0, 0)))
        m = jnp.pad(m, ((0, 0), (0, pad)))
        if xa is not None:
            xa = jnp.pad(xa, ((0, 0), (0, pad), (0, 0)))

    x2 = x.reshape(B * S_pad, D)
    xa2 = None if xa is None else xa.reshape(B * S_pad, D)
    # mask stays (B, S_pad): lane-dense blocks, ~S_pad x less VMEM than a column.

    mm_itemsize = jnp.dtype(matmul_dtype).itemsize
    if tb is None:
        tb = _choose_tb(B, S_pad, D, H, share_xa, return_sequences, mm_itemsize)
    assert B % tb == 0, "tb must divide B"
    assert tb == B or tb % 8 == 0, "tb must be a multiple of 8 (or the full batch)"
    grid = (B // tb,)
    R = tb * S_pad

    row_spec = pl.BlockSpec((R, D), lambda i: (i, 0))        # x / x_attention rows
    mask_spec = pl.BlockSpec((tb, S_pad), lambda i: (i, 0))  # lane-dense mask block
    w1_spec = pl.BlockSpec((D, H), lambda i: (0, 0))         # loaded once
    rowh_spec = pl.BlockSpec((1, H), lambda i: (0, 0))       # b1 / w2 row, loaded once
    smem_spec = pl.BlockSpec(memory_space=pltpu.MemorySpace.SMEM)   # b2 scalar

    in_specs = [row_spec]
    args = [x2]
    if not share_xa:
        in_specs.append(row_spec)
        args.append(xa2)
    in_specs += [mask_spec, w1_spec, rowh_spec, rowh_spec, smem_spec]
    args += [m, w1.astype(matmul_dtype), b1.reshape(1, H).astype(jnp.float32),
             w2.reshape(1, H).astype(jnp.float32), b2.reshape(1).astype(jnp.float32)]

    if return_sequences:
        out_shape = jax.ShapeDtypeStruct((B * S_pad, D), jnp.float32)
        out_spec = pl.BlockSpec((R, D), lambda i: (i, 0))
    else:
        out_shape = jax.ShapeDtypeStruct((B, D), jnp.float32)
        out_spec = pl.BlockSpec((tb, D), lambda i: (i, 0))

    # Layout-aware scoped-VMEM limit (v5e's 16 MiB default is the tightest).
    est = _chunk_vmem_bytes(tb, S_pad, D, H, share_xa, return_sequences, mm_itemsize)
    vmem_limit = int(min(max(2 * est, 32 << 20), 48 << 20))

    n_rows = B * S_pad
    cost = pl.CostEstimate(
        flops=2 * n_rows * D * H + 2 * n_rows * H + 2 * n_rows * D,
        transcendentals=n_rows * (H + 1),                    # tanh + exp
        bytes_accessed=(n_rows * D * 4
                        + (0 if share_xa else n_rows * D * mm_itemsize)
                        + n_rows * 4 + D * H * mm_itemsize + 2 * H * 4
                        + (n_rows if return_sequences else B) * D * 4),
    )

    out = pl.pallas_call(
        _make_attention_kernel(tb, S_pad, D, H, share_xa, return_sequences,
                               matmul_dtype),
        out_shape=out_shape,
        grid_spec=pltpu.PrefetchScalarGridSpec(
            num_scalar_prefetch=0,
            grid=grid,
            in_specs=in_specs,
            out_specs=out_spec,
        ),
        compiler_params=pltpu.CompilerParams(
            dimension_semantics=("parallel",),   # batch chunks split across TCs
            vmem_limit_bytes=vmem_limit,
        ),
        cost_estimate=cost,
    )(*args)

    if return_sequences:
        out = out.reshape(B, S_pad, D)
        if pad:
            out = out[:, :S, :]
        return out
    return out


# ---------------------------------------------------------------------------
# Pure-JAX reference + init
# ---------------------------------------------------------------------------
def ref_forward(x_text, mask, params, x_attention=None, return_sequences=False):
    """Pure-JAX reference mirroring the PyTorch module (all f32)."""
    if x_attention is None:
        x_attention = x_text
    w1, b1, w2, b2 = params
    a = jnp.tanh(x_attention @ w1 + b1)            # [B, S, H]
    logits = a @ w2 + b2                           # [B, S]
    e = jnp.exp(logits) * mask.astype(jnp.float32)
    s = jnp.sum(e, axis=-1, keepdims=True) + 1e-6
    attn = e / s
    out = x_text * attn[..., None]
    if not return_sequences:
        out = jnp.sum(out, axis=-2)
    return out


def init_params(key, D, H):
    """Deterministic init matching nn.Linear's default (uniform +-1/sqrt(fan_in))."""
    k1, k2, k3, k4 = jax.random.split(key, 4)
    bound1 = 1.0 / np.sqrt(D)
    bound2 = 1.0 / np.sqrt(H)
    w1 = jax.random.uniform(k1, (D, H), jnp.float32, -bound1, bound1)
    b1 = jax.random.uniform(k2, (H,), jnp.float32, -bound1, bound1)
    w2 = jax.random.uniform(k3, (H,), jnp.float32, -bound2, bound2)
    b2 = jax.random.uniform(k4, (), jnp.float32, -bound2, bound2)
    return (w1, b1, w2, b2)


if __name__ == "__main__":
    key = jax.random.PRNGKey(0)
    kx, kp, ka, kx2, kl2 = jax.random.split(key, 5)

    # --- small case: D=32 features, H=128 hidden (module default) ---
    B, S, D, H = 2, 8, 32, 128
    x_text = jax.random.normal(kx, (B, S, D), jnp.float32)
    lengths = jnp.array([8, 5], dtype=jnp.int32)          # ByteTensor-style mask
    mask = (jnp.arange(S)[None, :] < lengths[:, None]).astype(jnp.int32)
    params = init_params(kp, D, H)

    # return_sequences=False (module default) -> [B, D]
    out = jax.block_until_ready(attention_layer(x_text, mask, params))
    ref = ref_forward(x_text, mask, params)
    assert out.shape == (B, D)
    np.testing.assert_allclose(np.asarray(out), np.asarray(ref), rtol=1e-4, atol=1e-4)

    # return_sequences=True -> [B, S, D]
    out_seq = jax.block_until_ready(
        attention_layer(x_text, mask, params, return_sequences=True))
    ref_seq = ref_forward(x_text, mask, params, return_sequences=True)
    assert out_seq.shape == (B, S, D)
    np.testing.assert_allclose(np.asarray(out_seq), np.asarray(ref_seq),
                               rtol=1e-4, atol=1e-4)

    # separate x_attention path (non-shared kernel variant)
    x_attn = jax.random.normal(ka, (B, S, D), jnp.float32)
    out2 = jax.block_until_ready(
        attention_layer(x_text, mask, params, x_attention=x_attn))
    ref2 = ref_forward(x_text, mask, params, x_attention=x_attn)
    np.testing.assert_allclose(np.asarray(out2), np.asarray(ref2),
                               rtol=1e-4, atol=1e-4)

    # larger batch + unaligned seq-len: exercises batch chunking (grid >= 2)
    B2, S2 = 16, 10
    x_b = jax.random.normal(kx2, (B2, S2, D), jnp.float32)
    len_b = jax.random.randint(kl2, (B2,), 1, S2 + 1)
    mask_b = (jnp.arange(S2)[None, :] < len_b[:, None]).astype(jnp.int32)
    out_b = jax.block_until_ready(attention_layer(x_b, mask_b, params))
    ref_b = ref_forward(x_b, mask_b, params)
    np.testing.assert_allclose(np.asarray(out_b), np.asarray(ref_b),
                               rtol=1e-4, atol=1e-4)
    out_bs = jax.block_until_ready(
        attention_layer(x_b, mask_b, params, return_sequences=True))
    ref_bs = ref_forward(x_b, mask_b, params, return_sequences=True)
    np.testing.assert_allclose(np.asarray(out_bs), np.asarray(ref_bs),
                               rtol=1e-4, atol=1e-4)

    # bf16 MXU-input path (v6e/v7x optimization); looser tolerance vs f32 ref.
    out_bf = jax.block_until_ready(
        attention_layer(x_b, mask_b, params, matmul_dtype=jnp.bfloat16))
    np.testing.assert_allclose(np.asarray(out_bf), np.asarray(ref_b),
                               rtol=3e-2, atol=3e-2)

    print("KERNEL_OK")
</pallas_src>

<mosaic_0001>
module attributes {stable_mosaic.version = 11 : i64} {
  func.func @kernel(%arg0: i32, %arg1: memref<16x32xf32, #tpu.memory_space<vmem>>, %arg2: memref<2x8xf32, #tpu.memory_space<vmem>>, %arg3: memref<32x128xf32, #tpu.memory_space<vmem>>, %arg4: memref<1x128xf32, #tpu.memory_space<vmem>>, %arg5: memref<1x128xf32, #tpu.memory_space<vmem>>, %arg6: memref<1xf32, #tpu.memory_space<smem>>, %arg7: memref<2x32xf32, #tpu.memory_space<vmem>>) attributes {dimension_semantics = [#tpu.dimension_semantics<parallel>], iteration_bounds = array<i64: 1>, scalar_prefetch = 0 : i64, scratch_operands = 0 : i64, tpu.core_type = #tpu.core_type<tc>, window_params = [{transform_indices = @transform_0, window_bounds = array<i64: 16, 32>}, {transform_indices = @transform_1, window_bounds = array<i64: 2, 8>}, {pipeline_mode = #tpu.pipeline_mode<synchronous>, transform_indices = @transform_2, window_bounds = array<i64: 32, 128>}, {pipeline_mode = #tpu.pipeline_mode<synchronous>, transform_indices = @transform_3, window_bounds = array<i64: 1, 128>}, {pipeline_mode = #tpu.pipeline_mode<synchronous>, transform_indices = @transform_4, window_bounds = array<i64: 1, 128>}, {transform_indices = @transform_5, window_bounds = array<i64: 1>}, {transform_indices = @transform_6, window_bounds = array<i64: 2, 32>}]} {
    %c0 = arith.constant 0 : index
    %c0_0 = arith.constant 0 : index
    %0 = vector.load %arg1[%c0, %c0_0] : memref<16x32xf32, #tpu.memory_space<vmem>>, vector<16x32xf32>
    %c0_1 = arith.constant 0 : index
    %c0_2 = arith.constant 0 : index
    %1 = vector.load %arg2[%c0_1, %c0_2] : memref<2x8xf32, #tpu.memory_space<vmem>>, vector<2x8xf32>
    %c0_3 = arith.constant 0 : index
    %c0_4 = arith.constant 0 : index
    %2 = vector.load %arg3[%c0_3, %c0_4] : memref<32x128xf32, #tpu.memory_space<vmem>>, vector<32x128xf32>
    %c0_5 = arith.constant 0 : index
    %c0_6 = arith.constant 0 : index
    %3 = vector.load %arg4[%c0_5, %c0_6] : memref<1x128xf32, #tpu.memory_space<vmem>>, vector<1x128xf32>
    %c0_7 = arith.constant 0 : index
    %c0_8 = arith.constant 0 : index
    %4 = vector.load %arg5[%c0_7, %c0_8] : memref<1x128xf32, #tpu.memory_space<vmem>>, vector<1x128xf32>
    %c0_9 = arith.constant 0 : index
    %5 = memref.load %arg6[%c0_9] : memref<1xf32, #tpu.memory_space<smem>>
    %cst = arith.constant dense<0.000000e+00> : vector<16x128xf32>
    %6 = tpu.matmul %0, %2, %cst {dimension_numbers = #tpu.dot_dimension_numbers<[1], [0], [0], [1], [0, 0, 1, 1], [], []>} : vector<16x32xf32>, vector<32x128xf32>, vector<16x128xf32> -> vector<16x128xf32>
    %7 = vector.broadcast %3 : vector<1x128xf32> to vector<16x128xf32>
    %8 = arith.addf %6, %7 : vector<16x128xf32>
    %9 = math.tanh %8 : vector<16x128xf32>
    %10 = vector.broadcast %4 : vector<1x128xf32> to vector<16x128xf32>
    %11 = arith.mulf %9, %10 : vector<16x128xf32>
    %12 = vector.shape_cast %11 : vector<16x128xf32> to vector<2x8x128xf32>
    %cst_10 = arith.constant dense<0.000000e+00> : vector<2x8xf32>
    %13 = vector.multi_reduction <add>, %12, %cst_10 [2] : vector<2x8x128xf32> to vector<2x8xf32>
    %14 = vector.broadcast %5 : f32 to vector<2x8xf32>
    %15 = arith.addf %13, %14 : vector<2x8xf32>
    %16 = math.exp %15 : vector<2x8xf32>
    %17 = arith.mulf %16, %1 : vector<2x8xf32>
    %cst_11 = arith.constant dense<0.000000e+00> : vector<2xf32>
    %18 = vector.multi_reduction <add>, %17, %cst_11 [1] : vector<2x8xf32> to vector<2xf32>
    %19 = vector.shape_cast %18 : vector<2xf32> to vector<2x1xf32>
    %cst_12 = arith.constant 9.99999997E-7 : f32
    %20 = vector.broadcast %cst_12 : f32 to vector<2x1xf32>
    %21 = arith.addf %19, %20 : vector<2x1xf32>
    %22 = tpu.reciprocal %21 {approx = true} : vector<2x1xf32> -> vector<2x1xf32>
    %23 = arith.mulf %21, %22 : vector<2x1xf32>
    %cst_13 = arith.constant 2.000000e+00 : f32
    %24 = vector.broadcast %cst_13 : f32 to vector<2x1xf32>
    %25 = arith.subf %24, %23 : vector<2x1xf32>
    %26 = arith.mulf %22, %25 : vector<2x1xf32>
    %27 = vector.broadcast %26 : vector<2x1xf32> to vector<2x8xf32>
    %28 = arith.mulf %17, %27 : vector<2x8xf32>
    %29 = tpu.iota {dimensions = array<i32: 1>} : vector<2x8x8xi32>
    %30 = tpu.iota {dimensions = array<i32: 2>} : vector<2x8x8xi32>
    %31 = arith.cmpi eq, %29, %30 : vector<2x8x8xi32>
    %32 = vector.shape_cast %28 : vector<2x8xf32> to vector<2x1x8xf32>
    %cst_14 = arith.constant 0.000000e+00 : f32
    %33 = vector.shape_cast %32 : vector<2x1x8xf32> to vector<2x1x8xf32>
    %34 = vector.broadcast %33 : vector<2x1x8xf32> to vector<2x8x8xf32>
    %35 = vector.broadcast %cst_14 : f32 to vector<2x8x8xf32>
    %36 = arith.select %31, %34, %35 : vector<2x8x8xi1>, vector<2x8x8xf32>
    %cst_15 = arith.constant dense<0.000000e+00> : vector<2x8xf32>
    %37 = vector.multi_reduction <add>, %36, %cst_15 [2] : vector<2x8x8xf32> to vector<2x8xf32>
    %38 = vector.shape_cast %37 : vector<2x8xf32> to vector<2x8x1xf32>
    %39 = vector.shape_cast %38 : vector<2x8x1xf32> to vector<16x1xf32>
    %40 = vector.broadcast %39 : vector<16x1xf32> to vector<16x32xf32>
    %41 = arith.mulf %0, %40 : vector<16x32xf32>
    %42 = vector.shape_cast %41 : vector<16x32xf32> to vector<2x8x32xf32>
    %cst_16 = arith.constant dense<0.000000e+00> : vector<2x32xf32>
    %43 = vector.multi_reduction <add>, %42, %cst_16 [1] : vector<2x8x32xf32> to vector<2x32xf32>
    %c0_17 = arith.constant 0 : index
    %c0_18 = arith.constant 0 : index
    %44 = vector.load %arg7[%c0_17, %c0_18] : memref<2x32xf32, #tpu.memory_space<vmem>>, vector<2x32xf32>
    tpu.vector_store %arg7[%c0_17, %c0_18], %43 {strides = array<i32>} : memref<2x32xf32, #tpu.memory_space<vmem>>, vector<2x32xf32>,
    return
  }
  func.func @transform_0(%arg0: i32) -> (i32, i32) {
    %c0_i32 = arith.constant 0 : i32
    %c0_i32_0 = arith.constant 0 : i32
    return %arg0, %c0_i32 : i32, i32
  }
  func.func @transform_1(%arg0: i32) -> (i32, i32) {
    %c0_i32 = arith.constant 0 : i32
    %c0_i32_0 = arith.constant 0 : i32
    return %arg0, %c0_i32 : i32, i32
  }
  func.func @transform_2(%arg0: i32) -> (i32, i32) {
    %c0_i32 = arith.constant 0 : i32
    %c0_i32_0 = arith.constant 0 : i32
    %c0_i32_1 = arith.constant 0 : i32
    return %c0_i32, %c0_i32_0 : i32, i32
  }
  func.func @transform_3(%arg0: i32) -> (i32, i32) {
    %c0_i32 = arith.constant 0 : i32
    %c0_i32_0 = arith.constant 0 : i32
    %c0_i32_1 = arith.constant 0 : i32
    return %c0_i32, %c0_i32_0 : i32, i32
  }
  func.func @transform_4(%arg0: i32) -> (i32, i32) {
    %c0_i32 = arith.constant 0 : i32
    %c0_i32_0 = arith.constant 0 : i32
    %c0_i32_1 = arith.constant 0 : i32
    return %c0_i32, %c0_i32_0 : i32, i32
  }
  func.func @transform_5(%arg0: i32) -> i32 {
    %c0_i32 = arith.constant 0 : i32
    %c0_i32_0 = arith.constant 0 : i32
    return %c0_i32 : i32
  }
  func.func @transform_6(%arg0: i32) -> (i32, i32) {
    %c0_i32 = arith.constant 0 : i32
    %c0_i32_0 = arith.constant 0 : i32
    return %arg0, %c0_i32 : i32, i32
  }
}

</mosaic_0001>

<llo_original>
// kernel: tpu_custom_call.1
$region0: #{tpu_custom_call.1}
  #allocation0 [shape = 'u32[]', space=smem, size = 0x4, offset = 0x4, fixed_abs, tag = 'smem constant byte address 0x4 - core index']
  #allocation1 [shape = 'u32[72,128]{1,0:T(1,128)}', space=vmem, size = 0x9000, scoped, tag = 'internal scratch']
  #allocation2 [shape = 'f32[1]{0:T(128)S(6)}', space=smem, size = 0x200, scoped, tag = 'scoped memory for tpu_custom_call.1']
  %s0 = inlined_call_operand.hbm [shape: f32[16,32], index: 0, kind: input, shape index: {}]
  %s1 = inlined_call_operand.vmem [shape: f32[2,8], index: 1, kind: input, shape index: {}]
  %s2 = inlined_call_operand.hbm [shape: f32[32,128], index: 2, kind: input, shape index: {}]
  %s3 = inlined_call_operand.vmem [shape: f32[1,128], index: 3, kind: input, shape index: {}]
  %s4 = inlined_call_operand.vmem [shape: f32[1,128], index: 4, kind: input, shape index: {}]
  %s5 = inlined_call_operand.<no memory space> [shape: f32[1], index: 5, kind: input, shape index: {}]
  %s6 = inlined_call_operand.hbm [shape: f32[2,32], index: 6, kind: output, shape index: {}]
  %s7 = sld [smem:[#allocation0]]
  $region42: #{tpu_custom_call.1} parent=0
    _
  %s9 = ssub.s32 1, %s7
  %s10 = scalar_select 0, %s9, %s7
  %11 = sst [smem:[#allocation2]] %s5
  $region1: #{tpu_custom_call.1} parent=0
    #allocation3 [shape = 'u8[8192]{0}', space=vmem, size = 0x2000, scoped, tag = 'input window, operand 0, single buffered']
    #allocation4 [shape = 's32[1]{0}', space=sflag, size = 0x4, scoped, tag = 'scoped memory for tpu_custom_call.1']
    #allocation5 [shape = 's32[1]{0}', space=sflag, size = 0x4, scoped, tag = 'scoped memory for tpu_custom_call.1']
    #allocation6 [shape = 'u8[16384]{0}', space=vmem, size = 0x4000, scoped, tag = 'input window, operand 2, single buffered']
    #allocation7 [shape = 's32[1]{0}', space=sflag, size = 0x4, scoped, tag = 'scoped memory for tpu_custom_call.1']
    #allocation8 [shape = 'u8[1024]{0}', space=vmem, size = 0x400, scoped, tag = 'output window, operand 0, single buffered']
    %12 = vsyncpa [#allocation4], 0
    %13 = vsyncpa [#allocation7], 0
    %14 = vsyncpa [#allocation5], 0
    // Predicated region
    $region2: #{tpu_custom_call.1} parent=1 // pred_check
      _
    $region3: #{tpu_custom_call.1} parent=1 // pred_check_branch
      %16 = sbr.rel (0) target = $region5
    $region4: #{tpu_custom_call.1} parent=1 // pred_region
      %18 = vsyncadd [#allocation4], 0
      %s19 = sshll.u32 %s0, 4
      %s20 = int_to_ptr.hbm [resolvable:$true] %s19
      %s21 = sshll.u32 [#allocation3], 4
      %s22 = int_to_ptr.vmem [resolvable:$true] %s21
      %27 = dma.hbm_to_vmem [thread:$0]  %s20, 256, %s22, [#allocation4], 128, 128, 8
    $region5: #{tpu_custom_call.1} parent=1 // pred_fallthru
      _
    // Predicated region
    $region6: #{tpu_custom_call.1} parent=1 // pred_check
      _
    $region7: #{tpu_custom_call.1} parent=1 // pred_check_branch
      %29 = sbr.rel (0) target = $region9
    $region8: #{tpu_custom_call.1} parent=1 // pred_region
      _
    $region9: #{tpu_custom_call.1} parent=1 // pred_fallthru
      _
    // Predicated region
    $region10: #{tpu_custom_call.1} parent=1 // pred_check
      _
    $region11: #{tpu_custom_call.1} parent=1 // pred_check_branch
      %31 = sbr.rel (0) target = $region13
    $region12: #{tpu_custom_call.1} parent=1 // pred_region
      %33 = vsyncadd [#allocation7], 0
      %s34 = sshll.u32 %s2, 4
      %s35 = int_to_ptr.hbm [resolvable:$true] %s34
      %s36 = sshll.u32 [#allocation6], 4
      %s37 = int_to_ptr.vmem [resolvable:$true] %s36
      %42 = dma.hbm_to_vmem [thread:$0]  %s35, 512, %s37, [#allocation7], 128, 128, 8
    $region13: #{tpu_custom_call.1} parent=1 // pred_fallthru
      _
    // Predicated region
    $region14: #{tpu_custom_call.1} parent=1 // pred_check
      _
    $region15: #{tpu_custom_call.1} parent=1 // pred_check_branch
      %44 = sbr.rel (0) target = $region17
    $region16: #{tpu_custom_call.1} parent=1 // pred_region
      _
    $region17: #{tpu_custom_call.1} parent=1 // pred_fallthru
      _
    // Predicated region
    $region18: #{tpu_custom_call.1} parent=1 // pred_check
      _
    $region19: #{tpu_custom_call.1} parent=1 // pred_check_branch
      %46 = sbr.rel (0) target = $region21
    $region20: #{tpu_custom_call.1} parent=1 // pred_region
      _
    $region21: #{tpu_custom_call.1} parent=1 // pred_fallthru
      _
    // Predicated region
    $region22: #{tpu_custom_call.1} parent=1 // pred_check
      _
    $region23: #{tpu_custom_call.1} parent=1 // pred_check_branch
      %48 = sbr.rel (0) target = $region25
    $region24: #{tpu_custom_call.1} parent=1 // pred_region
      _
    $region25: #{tpu_custom_call.1} parent=1 // pred_fallthru
      _
    // Predicated region
    $region26: #{tpu_custom_call.1} parent=1 // pred_check
      _
    $region27: #{tpu_custom_call.1} parent=1 // pred_check_branch
      %50 = sbr.rel (0) target = $region29
    $region28: #{tpu_custom_call.1} parent=1 // pred_region
      %52 = dma.done [#allocation4], 256
    $region29: #{tpu_custom_call.1} parent=1 // pred_fallthru
      _
    // Predicated region
    $region30: #{tpu_custom_call.1} parent=1 // pred_check
      _
    $region31: #{tpu_custom_call.1} parent=1 // pred_check_branch
      %54 = sbr.rel (0) target = $region33
    $region32: #{tpu_custom_call.1} parent=1 // pred_region
      %56 = dma.done [#allocation7], 512
    $region33: #{tpu_custom_call.1} parent=1 // pred_fallthru
      _
    %v57 = vld [vmem:[#allocation3] sm:$0xff]
    %v58 = vld [vmem:[#allocation3 + $0x8] sm:$0xff]
    %v59 = vld [vmem:[%s1] sm:$0x3]
    %v60 = vld [vmem:[#allocation6] sm:$0xff]
    %v61 = vld [vmem:[#allocation6 + $0x8] sm:$0xff]
    %v62 = vld [vmem:[#allocation6 + $0x10] sm:$0xff]
    %v63 = vld [vmem:[#allocation6 + $0x18] sm:$0xff]
    %v64 = vld [vmem:[%s3] sm:$0x1]
    %v65 = vld [vmem:[%s4] sm:$0x1]
    %s66 = sld [smem:[#allocation2]]
    %v68 = vperm.slane %v64, 0
    %vm70 = vcmask 261120
    %v72 = vsel %vm70, %v57, 0
    %v75 = vsel %vm70, %v58, 0
    %77 = vmatpush.msra.mxu0 0.0
    %78 = vmatpush.msra.mxu0 0.0
    %79 = vmatpush.msra.mxu0 0.0
    %80 = vmatpush.msra.mxu0 0.0
    %81 = vmatpush.msra.mxu0 0.0
    %82 = vmatpush.msra.mxu0 0.0
    %83 = vmatpush.msra.mxu0 0.0
    %84 = vmatpush.msra.mxu0 0.0
    %85 = vmatpush.msra.mxu0 0.0
    %86 = vmatpush.msra.mxu0 0.0
    %87 = vmatpush.msra.mxu0 0.0
    %88 = vmatpush.msra.mxu0 0.0
    %89 = vmatpush.msra.mxu0 %v63
    %90 = vmatpush.msra.mxu0 %v62
    %91 = vmatpush.msra.mxu0 %v61
    %92 = vmatpush.msra.mxu0 %v60
    %93 = vmatmul.f32.gmra.mxu0 %v72
    %v94 = vpop.f32.mrf.mxu0
    %v95 = vadd.f32 %v68, %v94
    %96 = vmatmul.f32.gmra.mxu0 %v75
    %v97 = vpop.f32.mrf.mxu0
    %v98 = vadd.f32 %v68, %v97
    %99 = vdwg.mxu0
    %v100 = vtanh.pop %v95
    %v101 = vtanh.pop %v98
    %v103 = vperm.slane %v65, 0
    %v105 = vmul.f32 %v100, %v103
    %v106 = vmul.f32 %v101, %v103
    %107 = vadd.xlane.f32.xlu0 %v105
    %v108 = vpop.xlane.xlu0 %107
    %109 = vadd.xlane.f32.xlu0 %v106
    %v110 = vpop.xlane.xlu0 %109
    %v111 = vstv %s66
    %v112 = vadd.f32 %v108, %v111
    %v113 = vadd.f32 %v110, %v111
    %v114 = vmul.f32 %v112, 1.442695
    %v115 = vpow.pop %v114
    %v116 = vmul.f32 %v113, 1.442695
    %v117 = vpow.pop %v116
    %v119 = vperm.slane %v59, 0
    %v120 = vlaneseq
    %v121 = vshrl.u32 %v120, 7
    %123 = vset.pattern.permute.xlu0 %v121
    %124 = vperm.xlu0 %123, %v119
    %v125 = vpop.permute.xlu0 %124
    %v126 = vperm.slane %v59, 1
    %v127 = vlaneseq
    %v128 = vshrl.u32 %v127, 7
    %130 = vset.pattern.permute.xlu0 %v128
    %131 = vperm.xlu0 %130, %v126
    %v132 = vpop.permute.xlu0 %131
    %v135 = vmul.f32 %v115, %v125
    %v136 = vmul.f32 %v117, %v132
    %139 = vset.pattern.permute.xlu0 0
    %140 = vperm.xlu0 %139, %v135
    %v141 = vpop.permute.xlu0 %140
    %142 = vset.pattern.permute.xlu0 0
    %143 = vperm.xlu0 %142, %v136
    %v144 = vpop.permute.xlu0 %143
    %v145 = vlaneseq
    %v146 = vand.u32 %v145, 127
    %v147 = vperm.slane %v141, %v146
    %v148 = vperm.slane %v144, %v146
    %vm149 = vcmask 1041409
    %v150 = vsel %vm149, %v148, %v147
    %vm152 = vcmask 58368
    %v153 = vsel %vm152, %v150, 0.0
    %154 = vadd.xlane.f32.xlu0 %v153
    %v155 = vpop.xlane.xlu0 %154
    %v156 = vadd.f32 %v155, 1e-06
    %v157 = vrcp.pop %v156
    %v158 = vmul.f32 %v156, %v157
    %v159 = vsub.f32 2.0, %v158
    %v160 = vmul.f32 %v157, %v159
    %v162 = vperm.slane %v160, 0
    %v163 = vperm.slane %v160, 1
    %v166 = vmul.f32 %v135, %v162
    %v167 = vmul.f32 %v136, %v163
    %v168 = vlaneseq
    %v169 = vshrl.u32 %v168, 7
    %vm170 = vcmp.eq.s32.totalorder %v169, %v146
    %173 = vset.pattern.permute.xlu0 0
    %174 = vperm.xlu0 %173, %v166
    %v175 = vpop.permute.xlu0 %174
    %176 = vset.pattern.permute.xlu0 0
    %177 = vperm.xlu0 %176, %v167
    %v178 = vpop.permute.xlu0 %177
    %v179 = vperm.slane %v175, %v146
    %v180 = vperm.slane %v178, %v146
    %vm181 = vcmask 1042434
    %v182 = vsel %vm181, %v179, %v179
    %vm183 = vcmask 1043459
    %v184 = vsel %vm183, %v179, %v182
    %vm185 = vcmask 1044484
    %v186 = vsel %vm185, %v179, %v184
    %vm187 = vcmask 1045509
    %v188 = vsel %vm187, %v179, %v186
    %vm189 = vcmask 1046534
    %v190 = vsel %vm189, %v179, %v188
    %vm191 = vcmask 1047559
    %v192 = vsel %vm191, %v179, %v190
    %v193 = vsel %vm181, %v180, %v180
    %v194 = vsel %vm183, %v180, %v193
    %v195 = vsel %vm185, %v180, %v194
    %v196 = vsel %vm187, %v180, %v195
    %v197 = vsel %vm189, %v180, %v196
    %v198 = vsel %vm191, %v180, %v197
    %v201 = vsel %vm170, %v192, 0.0
    %v202 = vsel %vm170, %v198, 0.0
    %vm203 = vcmask 64512
    %v204 = vsel %vm203, %v201, 0.0
    %205 = vadd.xlane.f32.xlu0 %v204
    %v206 = vpop.xlane.xlu0 %205
    %v207 = vsel %vm203, %v202, 0.0
    %208 = vadd.xlane.f32.xlu0 %v207
    %v209 = vpop.xlane.xlu0 %208
    %v210 = vmul.f32 %v57, %v206
    %v211 = vmul.f32 %v58, %v209
    %v212 = vsel %vm70, %v210, 0.0
    %v213 = vrot.slane %v212, 4
    %v214 = vadd.f32 %v212, %v213
    %v215 = vrot.slane %v214, 2
    %v216 = vadd.f32 %v214, %v215
    %v217 = vrot.slane %v216, 1
    %v218 = vadd.f32 %v216, %v217
    %v219 = vsel %vm70, %v211, 0.0
    %v220 = vrot.slane %v219, 4
    %v221 = vadd.f32 %v219, %v220
    %v222 = vrot.slane %v221, 2
    %v223 = vadd.f32 %v221, %v222
    %v224 = vrot.slane %v223, 1
    %v225 = vadd.f32 %v223, %v224
    %v228 = vsel %vm149, %v225, %v218
    %vm230 = vcmask 254976
    %231 = vst.msk [vmem:[#allocation8] sm:$0x3] %vm230, %v228
    // Predicated region
    $region34: #{tpu_custom_call.1} parent=1 // pred_check
      _
    $region35: #{tpu_custom_call.1} parent=1 // pred_check_branch
      %233 = sbr.rel (0) target = $region37
    $region36: #{tpu_custom_call.1} parent=1 // pred_region
      %235 = vsyncadd [#allocation5], 0
      %s237 = sshll.u32 [#allocation8], 4
      %s238 = int_to_ptr.vmem [resolvable:$true] %s237
      %s239 = sshll.u32 %s6, 4
      %s240 = int_to_ptr.hbm [resolvable:$true] %s239
      %242 = dma.vmem_to_hbm [thread:$0]  %s238, 32, %s240, [#allocation5]
    $region37: #{tpu_custom_call.1} parent=1 // pred_fallthru
      _
    // Predicated region
    $region38: #{tpu_custom_call.1} parent=1 // pred_check
      _
    $region39: #{tpu_custom_call.1} parent=1 // pred_check_branch
      %244 = sbr.rel (0) target = $region41
    $region40: #{tpu_custom_call.1} parent=1 // pred_region
      %246 = dma.done [#allocation5], 32
    $region41: #{tpu_custom_call.1} parent=1 // pred_fallthru
      _
    %247 = vsyncpa [#allocation4], 1
    %248 = vsyncpa [#allocation7], 1
    %249 = vsyncpa [#allocation5], 1

</llo_original>
